<compile_context>
chip_gen: v6e
topology: v6e:2x2x1
jax: 0.10.0
libtpu: 0.0.40
codegen_flags: <defaults>
</compile_context>

<pallas_src>
import functools

import jax
import jax.numpy as jnp
from jax.experimental import pallas as pl
from jax.experimental.pallas import tpu as pltpu


def lws_kernel(x_ref, w_ref, s_ref, bs_ref, o_ref, acc_ref):
    """One (tm, tn) output tile; K (feature) reduction over grid axis 2."""
    k = pl.program_id(2)

    @pl.when(k == 0)
    def _():
        acc_ref[...] = jnp.zeros_like(acc_ref)

    # MXU matmul with f32 accumulation.
    acc_ref[...] += jnp.dot(x_ref[...], w_ref[...],
                            preferred_element_type=jnp.float32)

    @pl.when(k == pl.num_programs(2) - 1)
    def _():
        # Fused epilogue: per-class scale + (bias*scale) in one FMA (VPU).
        o_ref[...] = (acc_ref[...] * s_ref[...] + bs_ref[...]).astype(o_ref.dtype)


def _round_up(x, m):
    return ((x + m - 1) // m) * m


def lws_init_params(weight, bias, scales):
    """One-time parameter setup: transpose the frozen fc weight to (F, C)."""
    return weight.T, bias, scales


@functools.partial(jax.jit, static_argnames=("tm", "tn", "tk", "compute_dtype"))
def lws_forward(x, w_t, bias, scales, *, tm=256, tn=256, tk=512,
                compute_dtype=None):
    """x: (M, F). w_t: (F, C) (pre-transposed). bias, scales: (C,)."""
    M, F = x.shape
    F2, C = w_t.shape
    assert F == F2

    out_dtype = x.dtype

    # Fold bias into the scale:  (xW + b) * s == (xW) * s + (b * s)
    bs = (bias.astype(jnp.float32) * scales.astype(jnp.float32)).reshape(1, C)
    s2 = scales.astype(jnp.float32).reshape(1, C)

    # Clamp tile sizes to the (padded) problem, keeping (8, 128) alignment.
    tm = min(tm, _round_up(M, 8))
    tn = min(tn, _round_up(C, 128))
    tk = min(tk, _round_up(F, 128))

    Mp = _round_up(M, tm)
    Fp = _round_up(F, tk)
    Cp = _round_up(C, tn)

    if compute_dtype is not None:       # e.g. jnp.bfloat16 on v6e/v7x
        x = x.astype(compute_dtype)
        w_t = w_t.astype(compute_dtype)

    if (Mp, Fp) != (M, F):
        x = jnp.pad(x, ((0, Mp - M), (0, Fp - F)))
    if (Fp, Cp) != (F, C):
        w_t = jnp.pad(w_t, ((0, Fp - F), (0, Cp - C)))
    if Cp != C:
        s2 = jnp.pad(s2, ((0, 0), (0, Cp - C)))
        bs = jnp.pad(bs, ((0, 0), (0, Cp - C)))

    grid = (Mp // tm, Cp // tn, Fp // tk)

    cost = pl.CostEstimate(
        flops=2 * M * F * C,
        transcendentals=0,
        bytes_accessed=(x.size * x.dtype.itemsize
                        + w_t.size * w_t.dtype.itemsize
                        + M * C * jnp.dtype(out_dtype).itemsize),
    )

    out = pl.pallas_call(
        lws_kernel,
        out_shape=jax.ShapeDtypeStruct((Mp, Cp), out_dtype),
        grid_spec=pltpu.PrefetchScalarGridSpec(
            num_scalar_prefetch=0,
            grid=grid,
            in_specs=[
                pl.BlockSpec((tm, tk), lambda m, n, k: (m, k)),   # x row tile
                pl.BlockSpec((tk, tn), lambda m, n, k: (k, n)),   # streamed weight tile
                pl.BlockSpec((1, tn), lambda m, n, k: (0, n)),    # scales row
                pl.BlockSpec((1, tn), lambda m, n, k: (0, n)),    # bias*scales row
            ],
            out_specs=pl.BlockSpec((tm, tn), lambda m, n, k: (m, n)),
            scratch_shapes=[pltpu.VMEM((tm, tn), jnp.float32)],
        ),
        compiler_params=pltpu.CompilerParams(
            dimension_semantics=("parallel", "parallel", "arbitrary"),
        ),
        cost_estimate=cost,
    )(x, w_t, s2, bs)

    if (Mp, Cp) != (M, C):
        out = out[:M, :C]
    return out


if __name__ == "__main__":
    # Small shapes consistent with the module: batch=16, num_features=64,
    # num_classes=128.
    batch, num_features, num_classes = 16, 64, 128

    key = jax.random.PRNGKey(0)
    kx, kw, kb = jax.random.split(key, 3)

    x = jax.random.normal(kx, (batch, num_features), dtype=jnp.float32)

    # Deterministic "init" of the frozen fc parameters (nn.Linear shapes)
    # and the learnable per-class scales (ones, as in the module's __init__).
    weight = jax.random.normal(kw, (num_classes, num_features), dtype=jnp.float32) * 0.02
    bias = jax.random.normal(kb, (num_classes,), dtype=jnp.float32) * 0.01
    scales = jnp.ones((num_classes,), dtype=jnp.float32)

    # One-time parameter setup (weight transpose lives outside the hot path).
    w_t, bias_p, scales_p = lws_init_params(weight, bias, scales)

    out = lws_forward(x, w_t, bias_p, scales_p)
    out = jax.block_until_ready(out)

    # Reference check in plain JAX (highest precision to match f32 MXU accum).
    ref = (jnp.dot(x, weight.T, precision=jax.lax.Precision.HIGHEST) + bias) * scales
    assert out.shape == (batch, num_classes)
    assert jnp.allclose(out, ref, atol=1e-4, rtol=1e-4), "mismatch vs reference"

    print("KERNEL_OK")
</pallas_src>

<mosaic_0001>
module attributes {stable_mosaic.version = 11 : i64} {
  func.func @lws_kernel(%arg0: i32, %arg1: i32, %arg2: i32, %arg3: memref<16x128xf32, #tpu.memory_space<vmem>>, %arg4: memref<128x128xf32, #tpu.memory_space<vmem>>, %arg5: memref<1x128xf32, #tpu.memory_space<vmem>>, %arg6: memref<1x128xf32, #tpu.memory_space<vmem>>, %arg7: memref<16x128xf32, #tpu.memory_space<vmem>>, %arg8: memref<16x128xf32, #tpu.memory_space<vmem>>) attributes {dimension_semantics = [#tpu.dimension_semantics<parallel>, #tpu.dimension_semantics<parallel>, #tpu.dimension_semantics<arbitrary>], iteration_bounds = array<i64: 1, 1, 1>, scalar_prefetch = 0 : i64, scratch_operands = 1 : i64, tpu.core_type = #tpu.core_type<tc>, window_params = [{transform_indices = @transform_0, window_bounds = array<i64: 16, 128>}, {transform_indices = @transform_1, window_bounds = array<i64: 128, 128>}, {transform_indices = @transform_2, window_bounds = array<i64: 1, 128>}, {transform_indices = @transform_3, window_bounds = array<i64: 1, 128>}, {transform_indices = @transform_4, window_bounds = array<i64: 16, 128>}]} {
    %c0_i32 = arith.constant 0 : i32
    %0 = arith.cmpi eq, %arg2, %c0_i32 : i32
    %1 = arith.extui %0 : i1 to i32
    %c0_i32_0 = arith.constant 0 : i32
    %2 = arith.cmpi ne, %1, %c0_i32_0 : i32
    scf.if %2 {
      %cst_10 = arith.constant 0.000000e+00 : f32
      %12 = vector.broadcast %cst_10 : f32 to vector<16x128xf32>
      %c0_11 = arith.constant 0 : index
      %c0_12 = arith.constant 0 : index
      %13 = vector.load %arg8[%c0_11, %c0_12] : memref<16x128xf32, #tpu.memory_space<vmem>>, vector<16x128xf32>
      tpu.vector_store %arg8[%c0_11, %c0_12], %12 {strides = array<i32>} : memref<16x128xf32, #tpu.memory_space<vmem>>, vector<16x128xf32>,
    } else {
    }
    %c0 = arith.constant 0 : index
    %c0_1 = arith.constant 0 : index
    %3 = vector.load %arg8[%c0, %c0_1] : memref<16x128xf32, #tpu.memory_space<vmem>>, vector<16x128xf32>
    %c0_2 = arith.constant 0 : index
    %c0_3 = arith.constant 0 : index
    %4 = vector.load %arg3[%c0_2, %c0_3] : memref<16x128xf32, #tpu.memory_space<vmem>>, vector<16x128xf32>
    %c0_4 = arith.constant 0 : index
    %c0_5 = arith.constant 0 : index
    %5 = vector.load %arg4[%c0_4, %c0_5] : memref<128x128xf32, #tpu.memory_space<vmem>>, vector<128x128xf32>
    %cst = arith.constant dense<0.000000e+00> : vector<16x128xf32>
    %6 = tpu.matmul %4, %5, %cst {dimension_numbers = #tpu.dot_dimension_numbers<[1], [0], [0], [1], [0, 0, 1, 1], [], []>} : vector<16x128xf32>, vector<128x128xf32>, vector<16x128xf32> -> vector<16x128xf32>
    %7 = arith.addf %3, %6 : vector<16x128xf32>
    %c0_6 = arith.constant 0 : index
    %c0_7 = arith.constant 0 : index
    %8 = vector.load %arg8[%c0_6, %c0_7] : memref<16x128xf32, #tpu.memory_space<vmem>>, vector<16x128xf32>
    tpu.vector_store %arg8[%c0_6, %c0_7], %7 {strides = array<i32>} : memref<16x128xf32, #tpu.memory_space<vmem>>, vector<16x128xf32>,
    %c0_i32_8 = arith.constant 0 : i32
    %9 = arith.cmpi eq, %arg2, %c0_i32_8 : i32
    %10 = arith.extui %9 : i1 to i32
    %c0_i32_9 = arith.constant 0 : i32
    %11 = arith.cmpi ne, %10, %c0_i32_9 : i32
    scf.if %11 {
      %c0_10 = arith.constant 0 : index
      %c0_11 = arith.constant 0 : index
      %12 = vector.load %arg8[%c0_10, %c0_11] : memref<16x128xf32, #tpu.memory_space<vmem>>, vector<16x128xf32>
      %c0_12 = arith.constant 0 : index
      %c0_13 = arith.constant 0 : index
      %13 = vector.load %arg5[%c0_12, %c0_13] : memref<1x128xf32, #tpu.memory_space<vmem>>, vector<1x128xf32>
      %14 = vector.broadcast %13 : vector<1x128xf32> to vector<16x128xf32>
      %15 = arith.mulf %12, %14 : vector<16x128xf32>
      %c0_14 = arith.constant 0 : index
      %c0_15 = arith.constant 0 : index
      %16 = vector.load %arg6[%c0_14, %c0_15] : memref<1x128xf32, #tpu.memory_space<vmem>>, vector<1x128xf32>
      %17 = vector.broadcast %16 : vector<1x128xf32> to vector<16x128xf32>
      %18 = arith.addf %15, %17 : vector<16x128xf32>
      %c0_16 = arith.constant 0 : index
      %c0_17 = arith.constant 0 : index
      %19 = vector.load %arg7[%c0_16, %c0_17] : memref<16x128xf32, #tpu.memory_space<vmem>>, vector<16x128xf32>
      tpu.vector_store %arg7[%c0_16, %c0_17], %18 {strides = array<i32>} : memref<16x128xf32, #tpu.memory_space<vmem>>, vector<16x128xf32>,
    } else {
    }
    return
  }
  func.func @transform_0(%arg0: i32, %arg1: i32, %arg2: i32) -> (i32, i32) {
    %c0_i32 = arith.constant 0 : i32
    return %arg0, %arg2 : i32, i32
  }
  func.func @transform_1(%arg0: i32, %arg1: i32, %arg2: i32) -> (i32, i32) {
    %c0_i32 = arith.constant 0 : i32
    return %arg2, %arg1 : i32, i32
  }
  func.func @transform_2(%arg0: i32, %arg1: i32, %arg2: i32) -> (i32, i32) {
    %c0_i32 = arith.constant 0 : i32
    %c0_i32_0 = arith.constant 0 : i32
    return %c0_i32, %arg1 : i32, i32
  }
  func.func @transform_3(%arg0: i32, %arg1: i32, %arg2: i32) -> (i32, i32) {
    %c0_i32 = arith.constant 0 : i32
    %c0_i32_0 = arith.constant 0 : i32
    return %c0_i32, %arg1 : i32, i32
  }
  func.func @transform_4(%arg0: i32, %arg1: i32, %arg2: i32) -> (i32, i32) {
    %c0_i32 = arith.constant 0 : i32
    return %arg0, %arg1 : i32, i32
  }
}

</mosaic_0001>

<llo_original>
// kernel: lws_forward.1
$region0: #{lws_forward.1}
  #allocation0 [shape = 'u32[]', space=smem, size = 0x4, offset = 0x4, fixed_abs, tag = 'smem constant byte address 0x4 - core index']
  #allocation1 [shape = 'u32[144,128]{1,0:T(1,128)}', space=vmem, size = 0x12000, scoped, tag = 'internal scratch']
  #allocation2 [shape = 'f32[16,128]{1,0:T(8,128)}', space=vmem, size = 0x2000, scoped, tag = 'scratch operand']
  %s0 = inlined_call_operand.vmem [shape: f32[16,128], index: 0, kind: input, shape index: {}]
  %s1 = inlined_call_operand.vmem [shape: f32[128,128], index: 1, kind: input, shape index: {}]
  %s2 = inlined_call_operand.vmem [shape: f32[1,128], index: 2, kind: input, shape index: {}]
  %s3 = inlined_call_operand.vmem [shape: f32[1,128], index: 3, kind: input, shape index: {}]
  %s4 = inlined_call_operand.hbm [shape: f32[16,128], index: 4, kind: output, shape index: {}]
  %s5 = sld [smem:[#allocation0]]
  $region34: #{lws_forward.1} parent=0
    _
  %s7 = ssub.s32 1, %s5
  %s8 = scalar_select 0, %s7, %s5
  $region1: #{lws_forward.1} parent=0
    #allocation3 [shape = 'u8[8192]{0}', space=vmem, size = 0x2000, scoped, tag = 'output window, operand 0, single buffered']
    #allocation4 [shape = 's32[1]{0}', space=sflag, size = 0x4, scoped, tag = 'scoped memory for lws_forward.1']
    %9 = vsyncpa [#allocation4], 0
    // Predicated region
    $region2: #{lws_forward.1} parent=1 // pred_check
      _
    $region3: #{lws_forward.1} parent=1 // pred_check_branch
      %11 = sbr.rel (0) target = $region5
    $region4: #{lws_forward.1} parent=1 // pred_region
      _
    $region5: #{lws_forward.1} parent=1 // pred_fallthru
      _
    // Predicated region
    $region6: #{lws_forward.1} parent=1 // pred_check
      _
    $region7: #{lws_forward.1} parent=1 // pred_check_branch
      %13 = sbr.rel (0) target = $region9
    $region8: #{lws_forward.1} parent=1 // pred_region
      _
    $region9: #{lws_forward.1} parent=1 // pred_fallthru
      _
    // Predicated region
    $region10: #{lws_forward.1} parent=1 // pred_check
      _
    $region11: #{lws_forward.1} parent=1 // pred_check_branch
      %15 = sbr.rel (0) target = $region13
    $region12: #{lws_forward.1} parent=1 // pred_region
      _
    $region13: #{lws_forward.1} parent=1 // pred_fallthru
      _
    // Predicated region
    $region14: #{lws_forward.1} parent=1 // pred_check
      _
    $region15: #{lws_forward.1} parent=1 // pred_check_branch
      %17 = sbr.rel (0) target = $region17
    $region16: #{lws_forward.1} parent=1 // pred_region
      _
    $region17: #{lws_forward.1} parent=1 // pred_fallthru
      _
    %p18 = scmp.eq.s32.totalorder 0, 0
    // Predicated region
    $region18: #{lws_forward.1} parent=1 // pred_check
      %p19 = pneg %p18
    $region19: #{lws_forward.1} parent=1 // pred_check_branch
      %21 = sbr.rel (%p19) target = $region21
    $region20: #{lws_forward.1} parent=1 // pred_region
      %22 = vst [vmem:[#allocation2] sm:$0xff] 0.0
      %23 = vst [vmem:[#allocation2 + $0x8] sm:$0xff] 0.0
    $region21: #{lws_forward.1} parent=1 // pred_fallthru
      _
    %v24 = vld [vmem:[#allocation2] sm:$0xff]
    %v25 = vld [vmem:[#allocation2 + $0x8] sm:$0xff]
    %v26 = vld [vmem:[%s0] sm:$0xff]
    %v27 = vld [vmem:[%s0 + $0x8] sm:$0xff]
    %v28 = vld [vmem:[%s1] sm:$0xff]
    %v29 = vld [vmem:[%s1 + $0x8] sm:$0xff]
    %v30 = vld [vmem:[%s1 + $0x10] sm:$0xff]
    %v31 = vld [vmem:[%s1 + $0x18] sm:$0xff]
    %v32 = vld [vmem:[%s1 + $0x20] sm:$0xff]
    %v33 = vld [vmem:[%s1 + $0x28] sm:$0xff]
    %v34 = vld [vmem:[%s1 + $0x30] sm:$0xff]
    %v35 = vld [vmem:[%s1 + $0x38] sm:$0xff]
    %v36 = vld [vmem:[%s1 + $0x40] sm:$0xff]
    %v37 = vld [vmem:[%s1 + $0x48] sm:$0xff]
    %v38 = vld [vmem:[%s1 + $0x50] sm:$0xff]
    %v39 = vld [vmem:[%s1 + $0x58] sm:$0xff]
    %v40 = vld [vmem:[%s1 + $0x60] sm:$0xff]
    %v41 = vld [vmem:[%s1 + $0x68] sm:$0xff]
    %v42 = vld [vmem:[%s1 + $0x70] sm:$0xff]
    %v43 = vld [vmem:[%s1 + $0x78] sm:$0xff]
    %44 = vmatprep.subr.mxu0 0.0
    %45 = vmatpush1.msra.mxu0 %v43
    %46 = vmatprep.subr.mxu0 0.0
    %47 = vmatpush1.msra.mxu0 %v42
    %48 = vmatprep.subr.mxu0 0.0
    %49 = vmatpush1.msra.mxu0 %v41
    %50 = vmatprep.subr.mxu0 0.0
    %51 = vmatpush1.msra.mxu0 %v40
    %52 = vmatprep.subr.mxu0 0.0
    %53 = vmatpush1.msra.mxu0 %v39
    %54 = vmatprep.subr.mxu0 0.0
    %55 = vmatpush1.msra.mxu0 %v38
    %56 = vmatprep.subr.mxu0 0.0
    %57 = vmatpush1.msra.mxu0 %v37
    %58 = vmatprep.subr.mxu0 0.0
    %59 = vmatpush1.msra.mxu0 %v36
    %60 = vmatprep.subr.mxu0 0.0
    %61 = vmatpush1.msra.mxu0 %v35
    %62 = vmatprep.subr.mxu0 0.0
    %63 = vmatpush1.msra.mxu0 %v34
    %64 = vmatprep.subr.mxu0 0.0
    %65 = vmatpush1.msra.mxu0 %v33
    %66 = vmatprep.subr.mxu0 0.0
    %67 = vmatpush1.msra.mxu0 %v32
    %68 = vmatprep.subr.mxu0 0.0
    %69 = vmatpush1.msra.mxu0 %v31
    %70 = vmatprep.subr.mxu0 0.0
    %71 = vmatpush1.msra.mxu0 %v30
    %72 = vmatprep.subr.mxu0 0.0
    %73 = vmatpush1.msra.mxu0 %v29
    %74 = vmatprep.subr.mxu0 0.0
    %75 = vmatpush1.msra.mxu0 %v28
    %76 = vmatprep.subr.mxu0 0.0
    %77 = vmatpush2.msra.mxu0 0.0
    %78 = vmatprep.subr.mxu0 0.0
    %79 = vmatpush2.msra.mxu0 0.0
    %80 = vmatprep.subr.mxu0 0.0
    %81 = vmatpush2.msra.mxu0 0.0
    %82 = vmatprep.subr.mxu0 0.0
    %83 = vmatpush2.msra.mxu0 0.0
    %84 = vmatprep.subr.mxu0 0.0
    %85 = vmatpush2.msra.mxu0 0.0
    %86 = vmatprep.subr.mxu0 0.0
    %87 = vmatpush2.msra.mxu0 0.0
    %88 = vmatprep.subr.mxu0 0.0
    %89 = vmatpush2.msra.mxu0 0.0
    %90 = vmatprep.subr.mxu0 0.0
    %91 = vmatpush2.msra.mxu0 0.0
    %92 = vmatprep.subr.mxu0 0.0
    %93 = vmatpush2.msra.mxu0 0.0
    %94 = vmatprep.subr.mxu0 0.0
    %95 = vmatpush2.msra.mxu0 0.0
    %96 = vmatprep.subr.mxu0 0.0
    %97 = vmatpush2.msra.mxu0 0.0
    %98 = vmatprep.subr.mxu0 0.0
    %99 = vmatpush2.msra.mxu0 0.0
    %100 = vmatprep.subr.mxu0 0.0
    %101 = vmatpush2.msra.mxu0 0.0
    %102 = vmatprep.subr.mxu0 0.0
    %103 = vmatpush2.msra.mxu0 0.0
    %104 = vmatprep.subr.mxu0 0.0
    %105 = vmatpush2.msra.mxu0 0.0
    %106 = vmatprep.subr.mxu0 0.0
    %107 = vmatpush2.msra.mxu0 0.0
    %108 = vmatprep.mubr.f32.mxu0 0.0
    %109 = vmatmul.mubr.f32.gmra.mxu0 %v26
    %v110 = vpop.f32.mrf.mxu0
    %v111 = vadd.f32 0.0, %v110
    %v112 = vpop.f32.mrf.mxu0
    %113 = vmatprep.mubr.f32.mxu0 0.0
    %114 = vmatmul.mubr.f32.gmra.mxu0 %v27
    %v115 = vpop.f32.mrf.mxu0
    %v116 = vadd.f32 0.0, %v115
    %v117 = vpop.f32.mrf.mxu0
    %118 = vdwg.mxu0
    %v119 = vadd.f32 %v24, %v111
    %v120 = vadd.f32 %v25, %v116
    %121 = vst [vmem:[#allocation2] sm:$0xff] %v119
    %122 = vst [vmem:[#allocation2 + $0x8] sm:$0xff] %v120
    // Predicated region
    $region22: #{lws_forward.1} parent=1 // pred_check
      %p123 = pneg %p18
    $region23: #{lws_forward.1} parent=1 // pred_check_branch
      %125 = sbr.rel (%p123) target = $region25
    $region24: #{lws_forward.1} parent=1 // pred_region
      %v126 = vld [vmem:[#allocation2] sm:$0xff]
      %v127 = vld [vmem:[#allocation2 + $0x8] sm:$0xff]
      %v128 = vld [vmem:[%s2] sm:$0x1]
      %v130 = vlaneseq
      %v131 = vshrl.u32 %v130, 7
      %v132 = vsub.s32 0, %v131
      %v133 = vrot.slane %v128, %v132
      %v135 = vmul.f32 %v126, %v133
      %v136 = vmul.f32 %v127, %v133
      %v137 = vld [vmem:[%s3] sm:$0x1]
      %v139 = vlaneseq
      %v140 = vshrl.u32 %v139, 7
      %v141 = vsub.s32 0, %v140
      %v142 = vrot.slane %v137, %v141
      %v144 = vadd.f32 %v135, %v142
      %v145 = vadd.f32 %v136, %v142
      %146 = vst [vmem:[#allocation3] sm:$0xff] %v144
      %147 = vst [vmem:[#allocation3 + $0x8] sm:$0xff] %v145
    $region25: #{lws_forward.1} parent=1 // pred_fallthru
      _
    // Predicated region
    $region26: #{lws_forward.1} parent=1 // pred_check
      _
    $region27: #{lws_forward.1} parent=1 // pred_check_branch
      %149 = sbr.rel (0) target = $region29
    $region28: #{lws_forward.1} parent=1 // pred_region
      %s151 = ssub.s32 256, 256
      %152 = vsyncadd [#allocation4], %s151
      %s153 = sshll.u32 [#allocation3], 4
      %s154 = int_to_ptr.vmem [resolvable:$true] %s153
      %159 = dma.vmem_to_hbm [thread:$0]  %s154, 256, %s4, [#allocation4], 128, 128, 8
    $region29: #{lws_forward.1} parent=1 // pred_fallthru
      _
    // Predicated region
    $region30: #{lws_forward.1} parent=1 // pred_check
      _
    $region31: #{lws_forward.1} parent=1 // pred_check_branch
      %161 = sbr.rel (0) target = $region33
    $region32: #{lws_forward.1} parent=1 // pred_region
      %162 = dma.done [#allocation4], 256
    $region33: #{lws_forward.1} parent=1 // pred_fallthru
      _
    %163 = vsyncpa [#allocation4], 1

</llo_original>
